<compile_context>
chip_gen: v7x
topology: tpu7x:2x2x1
jax: 0.10.0
libtpu: 0.0.40
codegen_flags: <defaults>
</compile_context>

<pallas_src>
import functools

import jax
import jax.numpy as jnp
from jax.experimental import pallas as pl
from jax.experimental.pallas import tpu as pltpu


def _vb_embeddings_kernel(
    text_ref,     # (nbt*Lt, Wd)  flattened bert last_hidden_state tile (synthetic)
    vis_ref,      # (nbt*Lv, Vd)  flattened raw visual features tile
    w_word_ref,   # (Wd, H)
    b_word_ref,   # (1, H)  word bias + token_type_embeddings[0] (pre-folded, f32)
    w_vis_ref,    # (Vd, H)
    b_vis_ref,    # (1, H)  visual bias + visual_token_type_embeddings[1] (pre-folded, f32)
    ln_w_ref,     # (1, H)  f32
    ln_b_ref,     # (1, H)  f32
    out_ref,      # (nbt, Lt+Lv, H)
    *,
    nbt, lt, lv, hidden, eps,
):
    ln_w = ln_w_ref[...]
    ln_b = ln_b_ref[...]

    def project_layernorm(x, w_ref, b_ref):
        # (M, K) @ (K, H) on the MXU with f32 accumulation, then per-row LayerNorm
        # (normalization is over the hidden axis, so text/visual rows are independent).
        y = jnp.dot(x, w_ref[...], preferred_element_type=jnp.float32) + b_ref[...]
        mean = jnp.mean(y, axis=-1, keepdims=True)
        centered = y - mean
        var = jnp.mean(centered * centered, axis=-1, keepdims=True)
        return (centered * jax.lax.rsqrt(var + eps)) * ln_w + ln_b

    # --- text stream (rows already flattened in the wrapper) ---
    out_text = project_layernorm(text_ref[...], w_word_ref, b_word_ref)
    out_ref[:, :lt, :] = out_text.reshape(nbt, lt, hidden).astype(out_ref.dtype)

    # --- visual stream ---
    out_vis = project_layernorm(vis_ref[...], w_vis_ref, b_vis_ref)
    out_ref[:, lt:, :] = out_vis.reshape(nbt, lv, hidden).astype(out_ref.dtype)
    # dropout: eval mode -> identity


def _tpu_memory_model():
    """(pipeline byte budget, tensorcores per chip, physical VMEM bytes)."""
    phys_vmem = 128 * 1024 * 1024   # v5e / v6e
    n_cores = 1
    try:
        kind = jax.devices()[0].device_kind.lower()
    except Exception:
        kind = ""
    if "v7" in kind:
        phys_vmem = 64 * 1024 * 1024
        n_cores = 2
    try:  # refine from the hardware query when available
        info = pltpu.get_tpu_info()
        phys_vmem = int(getattr(info, "vmem_capacity_bytes", phys_vmem)) or phys_vmem
    except Exception:
        pass
    # ~40% of physical VMEM for the double-buffered activation/output tiles,
    # leaving headroom for weights, semaphores and compiler scratch.
    return int(phys_vmem * 0.4), n_cores, phys_vmem


def _pick_batch_tile(batch, lt, lv, wd, vd, hidden, act_bytes, out_bytes,
                     vmem_budget, n_cores):
    """Batch-elements per grid step, sized from a VMEM byte budget.

    Counts double-buffered input tiles + output tile per batch element plus the
    (conservatively double-buffered) weight/bias constants. On single-TC chips
    (v5e/v6e) the whole batch is preferred in one step; on multi-TC chips (v7x)
    at least n_cores grid steps are kept so dimension_semantics=("parallel",)
    can shard them.
    """
    L = lt + lv
    per_b = (2 * (lt * wd + lv * vd) * act_bytes   # text + visual input tiles, x2 buffers
             + 2 * L * hidden * out_bytes)          # output tile, x2 buffers
    const_bytes = 2 * ((wd + vd) * hidden * act_bytes + 4 * hidden * 4)
    avail = max(vmem_budget - const_bytes, per_b)
    nbt = max(1, min(batch, int(avail // per_b)))
    if n_cores > 1 and batch > 1:
        nbt = min(nbt, max(1, batch // n_cores))
    return nbt


def visual_bert_embeddings(text_hidden, visual_embeds, params, *, eps=1e-12,
                           compute_dtype=jnp.bfloat16, out_dtype=jnp.float32,
                           materialize_batch_positions=False):
    """text_hidden: (B, Lt, Wd), visual_embeds: (B, Lv, Vd).

    Returns (embeddings (B, L, H), position table). The position output is
    batch-invariant, so by default the (L, H) row is returned (broadcast it in
    the consumer's jit); pass materialize_batch_positions=True for (B, L, H).
    """
    B, Lt, Wd = text_hidden.shape
    Bv, Lv, Vd = visual_embeds.shape
    assert B == Bv
    H = params["w_word"].shape[1]
    L = Lt + Lv
    # Keep the in-kernel (M, H) -> (nbt, L_x, H) reshapes and the seq-offset
    # store sublane-aligned (no VMEM relayout copies, unmasked stores).
    assert Lt % 8 == 0 and Lv % 8 == 0, "Lt and Lv must be multiples of 8"
    if jnp.dtype(out_dtype) == jnp.dtype(jnp.bfloat16):
        assert Lt % 16 == 0, "bf16 output needs Lt % 16 == 0 for an unmasked visual store"

    # Fold the constant token-type rows (ids all-0 text / all-1 visual) into the
    # projection biases; biases / LN params stay f32 (applied post-accumulation).
    b_word = (params["b_word"] + params["token_type_emb"][0]).astype(jnp.float32).reshape(1, H)
    b_vis = (params["b_vis"] + params["visual_token_type_emb"][1]).astype(jnp.float32).reshape(1, H)
    ln_w = params["ln_w"].astype(jnp.float32).reshape(1, H)
    ln_b = params["ln_b"].astype(jnp.float32).reshape(1, H)

    # bf16 (by default) data movement for activations and matmul weights.
    w_word = params["w_word"].astype(compute_dtype)
    w_vis = params["w_vis"].astype(compute_dtype)
    text = text_hidden.astype(compute_dtype)
    vis = visual_embeds.astype(compute_dtype)

    act_bytes = jnp.dtype(compute_dtype).itemsize
    out_bytes = jnp.dtype(out_dtype).itemsize
    vmem_budget, n_cores, phys_vmem = _tpu_memory_model()
    nbt = _pick_batch_tile(B, Lt, Lv, Wd, Vd, H, act_bytes, out_bytes,
                           vmem_budget, n_cores)

    # Robust to batches without nice divisors: pad B to a multiple of the tile.
    n_steps = -(-B // nbt)
    B_pad = n_steps * nbt
    if B_pad != B:
        text = jnp.pad(text, ((0, B_pad - B), (0, 0), (0, 0)))
        vis = jnp.pad(vis, ((0, B_pad - B), (0, 0), (0, 0)))

    # Flatten batch*seq into the matmul M dimension in the wrapper (contiguous
    # reshape = free); BlockSpec tiles the row axis directly.
    text2d = text.reshape(B_pad * Lt, Wd)
    vis2d = vis.reshape(B_pad * Lv, Vd)

    # Raise the scoped-VMEM limit so the chosen tile is never silently capped
    # (v5e default is only 16 MiB); stay well below physical VMEM.
    per_step = 2 * nbt * (Lt * Wd + Lv * Vd) * act_bytes + 2 * nbt * L * H * out_bytes
    const_bytes = 2 * ((Wd + Vd) * H * act_bytes + 4 * H * 4)
    vmem_limit = int(min(phys_vmem * 3 // 4,
                         max(32 * 1024 * 1024, 2 * (per_step + const_bytes))))

    kernel = functools.partial(
        _vb_embeddings_kernel, nbt=nbt, lt=Lt, lv=Lv, hidden=H, eps=eps)

    cost = pl.CostEstimate(
        flops=2 * B_pad * (Lt * Wd + Lv * Vd) * H + 10 * B_pad * L * H,
        transcendentals=B_pad * L,
        bytes_accessed=(B_pad * (Lt * Wd + Lv * Vd) * act_bytes
                        + (Wd + Vd) * H * act_bytes + 4 * H * 4
                        + B_pad * L * H * out_bytes),
    )

    const2d = lambda shape: pl.BlockSpec(shape, lambda i: (0, 0))

    emb = pl.pallas_call(
        kernel,
        out_shape=jax.ShapeDtypeStruct((B_pad, L, H), out_dtype),
        grid_spec=pltpu.PrefetchScalarGridSpec(
            num_scalar_prefetch=0,
            grid=(n_steps,),
            in_specs=[
                pl.BlockSpec((nbt * Lt, Wd), lambda i: (i, 0)),
                pl.BlockSpec((nbt * Lv, Vd), lambda i: (i, 0)),
                const2d((Wd, H)),
                const2d((1, H)),
                const2d((Vd, H)),
                const2d((1, H)),
                const2d((1, H)),
                const2d((1, H)),
            ],
            out_specs=pl.BlockSpec((nbt, L, H), lambda i: (i, 0, 0)),
        ),
        compiler_params=pltpu.CompilerParams(
            dimension_semantics=("parallel",),
            vmem_limit_bytes=vmem_limit),
        cost_estimate=cost,
    )(text2d, vis2d, w_word, b_word, w_vis, b_vis, ln_w, ln_b)

    if B_pad != B:
        emb = emb[:B]

    # Final position embeddings are input-independent and identical per batch
    # element -> an (L, H) table; no (B, L, H) HBM writeback unless asked for.
    pos_row = jnp.concatenate(
        [params["position_emb"][:Lt, :],
         jnp.broadcast_to(params["visual_position_emb"][0:1, :], (Lv, H))],
        axis=0)                                            # (L, H)
    if materialize_batch_positions:
        return emb, jnp.broadcast_to(pos_row[None], (B, L, H))
    return emb, pos_row


def _reference(text_hidden, visual_embeds, params, eps=1e-12):
    """Pure-JAX f32 reference mirroring the PyTorch forward (same code path)."""
    B, Lt, _ = text_hidden.shape
    _, Lv, _ = visual_embeds.shape
    H = params["w_word"].shape[1]
    te = text_hidden @ params["w_word"] + params["b_word"]
    ve = visual_embeds @ params["w_vis"] + params["b_vis"]
    emb_text = te + params["token_type_emb"][0][None, None, :]
    emb_vis = ve + params["visual_token_type_emb"][1][None, None, :]
    emb = jnp.concatenate([emb_text, emb_vis], axis=1)
    mean = emb.mean(-1, keepdims=True)
    var = ((emb - mean) ** 2).mean(-1, keepdims=True)
    emb = (emb - mean) / jnp.sqrt(var + eps) * params["ln_w"] + params["ln_b"]
    pos_text = jnp.broadcast_to(params["position_emb"][:Lt][None], (B, Lt, H))
    vis_pos = jnp.broadcast_to(params["visual_position_emb"][0][None, None, :], (B, Lv, H))
    return emb, jnp.concatenate([pos_text, vis_pos], axis=1)


if __name__ == "__main__":
    # Small config consistent with the module's __init__.
    B, Lt, Lv = 4, 8, 8
    word_embedding_dim, visual_embedding_dim = 48, 64
    hidden_size = 128
    max_position_embeddings, type_vocab_size = 64, 2
    layer_norm_eps = 1e-12

    key = jax.random.PRNGKey(0)
    ks = jax.random.split(key, 8)

    position_emb = 0.02 * jax.random.normal(
        ks[0], (max_position_embeddings, hidden_size), jnp.float32)
    token_type_emb = 0.02 * jax.random.normal(
        ks[1], (type_vocab_size, hidden_size), jnp.float32)
    params = {
        "position_emb": position_emb,
        "token_type_emb": token_type_emb,
        # config.special_visual_initialize=True -> visual tables are copies.
        "visual_position_emb": position_emb,
        "visual_token_type_emb": token_type_emb,
        "w_word": 0.05 * jax.random.normal(ks[2], (word_embedding_dim, hidden_size), jnp.float32),
        "b_word": 0.05 * jax.random.normal(ks[3], (hidden_size,), jnp.float32),
        "w_vis": 0.05 * jax.random.normal(ks[4], (visual_embedding_dim, hidden_size), jnp.float32),
        "b_vis": 0.05 * jax.random.normal(ks[5], (hidden_size,), jnp.float32),
        "ln_w": jnp.ones((hidden_size,), jnp.float32),
        "ln_b": jnp.zeros((hidden_size,), jnp.float32),
    }

    # Synthetic stand-in for bert_model(...).last_hidden_state (see TODO above).
    text_hidden = jax.random.normal(ks[6], (B, Lt, word_embedding_dim), jnp.float32)
    visual_embeds = jax.random.normal(ks[7], (B, Lv, visual_embedding_dim), jnp.float32)

    emb_ref, pos_ref = _reference(text_hidden, visual_embeds, params, eps=layer_norm_eps)

    # 1) Exactness check: f32 compute path matches the f32 reference tightly.
    emb32, pos_row = visual_bert_embeddings(
        text_hidden, visual_embeds, params, eps=layer_norm_eps,
        compute_dtype=jnp.float32)
    emb32, pos_row = jax.block_until_ready((emb32, pos_row))
    assert jnp.allclose(emb32, emb_ref, atol=1e-5, rtol=1e-5)
    pos_full = jnp.broadcast_to(pos_row[None], (B, Lt + Lv, hidden_size))
    assert jnp.allclose(pos_full, pos_ref, atol=1e-6, rtol=1e-6)

    # 2) Default fast path: bf16 data movement / MXU inputs, f32 accumulation & LN.
    emb_bf, _ = visual_bert_embeddings(
        text_hidden, visual_embeds, params, eps=layer_norm_eps)
    emb_bf = jax.block_until_ready(emb_bf)
    assert jnp.allclose(emb_bf, emb_ref, atol=2e-2, rtol=2e-2)

    print("KERNEL_OK")
</pallas_src>

<mosaic_0001>
module attributes {stable_mosaic.version = 11 : i64} {
  func.func @_vb_embeddings_kernel(%arg0: i32, %arg1: memref<32x48xf32, #tpu.memory_space<vmem>>, %arg2: memref<32x64xf32, #tpu.memory_space<vmem>>, %arg3: memref<48x128xf32, #tpu.memory_space<vmem>>, %arg4: memref<1x128xf32, #tpu.memory_space<vmem>>, %arg5: memref<64x128xf32, #tpu.memory_space<vmem>>, %arg6: memref<1x128xf32, #tpu.memory_space<vmem>>, %arg7: memref<1x128xf32, #tpu.memory_space<vmem>>, %arg8: memref<1x128xf32, #tpu.memory_space<vmem>>, %arg9: memref<4x16x128xf32, #tpu.memory_space<vmem>>) attributes {dimension_semantics = [#tpu.dimension_semantics<parallel>], iteration_bounds = array<i64: 1>, scalar_prefetch = 0 : i64, scratch_operands = 0 : i64, tpu.core_type = #tpu.core_type<tc>, window_params = [{transform_indices = @transform_0, window_bounds = array<i64: 32, 48>}, {transform_indices = @transform_1, window_bounds = array<i64: 32, 64>}, {pipeline_mode = #tpu.pipeline_mode<synchronous>, transform_indices = @transform_2, window_bounds = array<i64: 48, 128>}, {pipeline_mode = #tpu.pipeline_mode<synchronous>, transform_indices = @transform_3, window_bounds = array<i64: 1, 128>}, {pipeline_mode = #tpu.pipeline_mode<synchronous>, transform_indices = @transform_4, window_bounds = array<i64: 64, 128>}, {pipeline_mode = #tpu.pipeline_mode<synchronous>, transform_indices = @transform_5, window_bounds = array<i64: 1, 128>}, {pipeline_mode = #tpu.pipeline_mode<synchronous>, transform_indices = @transform_6, window_bounds = array<i64: 1, 128>}, {pipeline_mode = #tpu.pipeline_mode<synchronous>, transform_indices = @transform_7, window_bounds = array<i64: 1, 128>}, {transform_indices = @transform_8, window_bounds = array<i64: 4, 16, 128>}]} {
    %c0 = arith.constant 0 : index
    %c0_0 = arith.constant 0 : index
    %0 = vector.load %arg7[%c0, %c0_0] : memref<1x128xf32, #tpu.memory_space<vmem>>, vector<1x128xf32>
    %c0_1 = arith.constant 0 : index
    %c0_2 = arith.constant 0 : index
    %1 = vector.load %arg8[%c0_1, %c0_2] : memref<1x128xf32, #tpu.memory_space<vmem>>, vector<1x128xf32>
    %c0_3 = arith.constant 0 : index
    %c0_4 = arith.constant 0 : index
    %2 = vector.load %arg1[%c0_3, %c0_4] : memref<32x48xf32, #tpu.memory_space<vmem>>, vector<32x48xf32>
    %c0_5 = arith.constant 0 : index
    %c0_6 = arith.constant 0 : index
    %3 = vector.load %arg3[%c0_5, %c0_6] : memref<48x128xf32, #tpu.memory_space<vmem>>, vector<48x128xf32>
    %cst = arith.constant dense<0.000000e+00> : vector<32x128xf32>
    %4 = tpu.matmul %2, %3, %cst {dimension_numbers = #tpu.dot_dimension_numbers<[1], [0], [0], [1], [0, 0, 1, 1], [], []>} : vector<32x48xf32>, vector<48x128xf32>, vector<32x128xf32> -> vector<32x128xf32>
    %c0_7 = arith.constant 0 : index
    %c0_8 = arith.constant 0 : index
    %5 = vector.load %arg4[%c0_7, %c0_8] : memref<1x128xf32, #tpu.memory_space<vmem>>, vector<1x128xf32>
    %6 = vector.broadcast %5 : vector<1x128xf32> to vector<32x128xf32>
    %7 = arith.addf %4, %6 : vector<32x128xf32>
    %cst_9 = arith.constant dense<0.000000e+00> : vector<32xf32>
    %8 = vector.multi_reduction <add>, %7, %cst_9 [1] : vector<32x128xf32> to vector<32xf32>
    %9 = vector.shape_cast %8 : vector<32xf32> to vector<32x1xf32>
    %cst_10 = arith.constant 1.280000e+02 : f32
    %10 = vector.broadcast %cst_10 : f32 to vector<32x1xf32>
    %11 = arith.divf %9, %10 : vector<32x1xf32>
    %12 = vector.broadcast %11 : vector<32x1xf32> to vector<32x128xf32>
    %13 = arith.subf %7, %12 : vector<32x128xf32>
    %14 = arith.mulf %13, %13 : vector<32x128xf32>
    %cst_11 = arith.constant dense<0.000000e+00> : vector<32xf32>
    %15 = vector.multi_reduction <add>, %14, %cst_11 [1] : vector<32x128xf32> to vector<32xf32>
    %16 = vector.shape_cast %15 : vector<32xf32> to vector<32x1xf32>
    %cst_12 = arith.constant 1.280000e+02 : f32
    %17 = vector.broadcast %cst_12 : f32 to vector<32x1xf32>
    %18 = arith.divf %16, %17 : vector<32x1xf32>
    %cst_13 = arith.constant 9.99999996E-13 : f32
    %19 = vector.broadcast %cst_13 : f32 to vector<32x1xf32>
    %20 = arith.addf %18, %19 : vector<32x1xf32>
    %21 = math.rsqrt %20 : vector<32x1xf32>
    %22 = vector.broadcast %21 : vector<32x1xf32> to vector<32x128xf32>
    %23 = arith.mulf %13, %22 : vector<32x128xf32>
    %24 = vector.broadcast %0 : vector<1x128xf32> to vector<32x128xf32>
    %25 = arith.mulf %23, %24 : vector<32x128xf32>
    %26 = vector.broadcast %1 : vector<1x128xf32> to vector<32x128xf32>
    %27 = arith.addf %25, %26 : vector<32x128xf32>
    %28 = vector.shape_cast %27 : vector<32x128xf32> to vector<4x8x128xf32>
    %c0_14 = arith.constant 0 : index
    %c0_15 = arith.constant 0 : index
    %c0_16 = arith.constant 0 : index
    %29 = vector.load %arg9[%c0_14, %c0_15, %c0_16] : memref<4x16x128xf32, #tpu.memory_space<vmem>>, vector<4x8x128xf32>
    tpu.vector_store %arg9[%c0_14, %c0_15, %c0_16], %28 {strides = array<i32>} : memref<4x16x128xf32, #tpu.memory_space<vmem>>, vector<4x8x128xf32>,
    %c0_17 = arith.constant 0 : index
    %c0_18 = arith.constant 0 : index
    %30 = vector.load %arg2[%c0_17, %c0_18] : memref<32x64xf32, #tpu.memory_space<vmem>>, vector<32x64xf32>
    %c0_19 = arith.constant 0 : index
    %c0_20 = arith.constant 0 : index
    %31 = vector.load %arg5[%c0_19, %c0_20] : memref<64x128xf32, #tpu.memory_space<vmem>>, vector<64x128xf32>
    %cst_21 = arith.constant dense<0.000000e+00> : vector<32x128xf32>
    %32 = tpu.matmul %30, %31, %cst_21 {dimension_numbers = #tpu.dot_dimension_numbers<[1], [0], [0], [1], [0, 0, 1, 1], [], []>} : vector<32x64xf32>, vector<64x128xf32>, vector<32x128xf32> -> vector<32x128xf32>
    %c0_22 = arith.constant 0 : index
    %c0_23 = arith.constant 0 : index
    %33 = vector.load %arg6[%c0_22, %c0_23] : memref<1x128xf32, #tpu.memory_space<vmem>>, vector<1x128xf32>
    %34 = vector.broadcast %33 : vector<1x128xf32> to vector<32x128xf32>
    %35 = arith.addf %32, %34 : vector<32x128xf32>
    %cst_24 = arith.constant dense<0.000000e+00> : vector<32xf32>
    %36 = vector.multi_reduction <add>, %35, %cst_24 [1] : vector<32x128xf32> to vector<32xf32>
    %37 = vector.shape_cast %36 : vector<32xf32> to vector<32x1xf32>
    %cst_25 = arith.constant 1.280000e+02 : f32
    %38 = vector.broadcast %cst_25 : f32 to vector<32x1xf32>
    %39 = arith.divf %37, %38 : vector<32x1xf32>
    %40 = vector.broadcast %39 : vector<32x1xf32> to vector<32x128xf32>
    %41 = arith.subf %35, %40 : vector<32x128xf32>
    %42 = arith.mulf %41, %41 : vector<32x128xf32>
    %cst_26 = arith.constant dense<0.000000e+00> : vector<32xf32>
    %43 = vector.multi_reduction <add>, %42, %cst_26 [1] : vector<32x128xf32> to vector<32xf32>
    %44 = vector.shape_cast %43 : vector<32xf32> to vector<32x1xf32>
    %cst_27 = arith.constant 1.280000e+02 : f32
    %45 = vector.broadcast %cst_27 : f32 to vector<32x1xf32>
    %46 = arith.divf %44, %45 : vector<32x1xf32>
    %cst_28 = arith.constant 9.99999996E-13 : f32
    %47 = vector.broadcast %cst_28 : f32 to vector<32x1xf32>
    %48 = arith.addf %46, %47 : vector<32x1xf32>
    %49 = math.rsqrt %48 : vector<32x1xf32>
    %50 = vector.broadcast %49 : vector<32x1xf32> to vector<32x128xf32>
    %51 = arith.mulf %41, %50 : vector<32x128xf32>
    %52 = vector.broadcast %0 : vector<1x128xf32> to vector<32x128xf32>
    %53 = arith.mulf %51, %52 : vector<32x128xf32>
    %54 = vector.broadcast %1 : vector<1x128xf32> to vector<32x128xf32>
    %55 = arith.addf %53, %54 : vector<32x128xf32>
    %56 = vector.shape_cast %55 : vector<32x128xf32> to vector<4x8x128xf32>
    %c0_29 = arith.constant 0 : index
    %c8 = arith.constant 8 : index
    %c0_30 = arith.constant 0 : index
    %57 = vector.load %arg9[%c0_29, %c8, %c0_30] : memref<4x16x128xf32, #tpu.memory_space<vmem>>, vector<4x8x128xf32>
    tpu.vector_store %arg9[%c0_29, %c8, %c0_30], %56 {strides = array<i32>} : memref<4x16x128xf32, #tpu.memory_space<vmem>>, vector<4x8x128xf32>,
    return
  }
  func.func @transform_0(%arg0: i32) -> (i32, i32) {
    %c0_i32 = arith.constant 0 : i32
    %c0_i32_0 = arith.constant 0 : i32
    return %arg0, %c0_i32 : i32, i32
  }
  func.func @transform_1(%arg0: i32) -> (i32, i32) {
    %c0_i32 = arith.constant 0 : i32
    %c0_i32_0 = arith.constant 0 : i32
    return %arg0, %c0_i32 : i32, i32
  }
  func.func @transform_2(%arg0: i32) -> (i32, i32) {
    %c0_i32 = arith.constant 0 : i32
    %c0_i32_0 = arith.constant 0 : i32
    %c0_i32_1 = arith.constant 0 : i32
    return %c0_i32, %c0_i32_0 : i32, i32
  }
  func.func @transform_3(%arg0: i32) -> (i32, i32) {
    %c0_i32 = arith.constant 0 : i32
    %c0_i32_0 = arith.constant 0 : i32
    %c0_i32_1 = arith.constant 0 : i32
    return %c0_i32, %c0_i32_0 : i32, i32
  }
  func.func @transform_4(%arg0: i32) -> (i32, i32) {
    %c0_i32 = arith.constant 0 : i32
    %c0_i32_0 = arith.constant 0 : i32
    %c0_i32_1 = arith.constant 0 : i32
    return %c0_i32, %c0_i32_0 : i32, i32
  }
  func.func @transform_5(%arg0: i32) -> (i32, i32) {
    %c0_i32 = arith.constant 0 : i32
    %c0_i32_0 = arith.constant 0 : i32
    %c0_i32_1 = arith.constant 0 : i32
    return %c0_i32, %c0_i32_0 : i32, i32
  }
  func.func @transform_6(%arg0: i32) -> (i32, i32) {
    %c0_i32 = arith.constant 0 : i32
    %c0_i32_0 = arith.constant 0 : i32
    %c0_i32_1 = arith.constant 0 : i32
    return %c0_i32, %c0_i32_0 : i32, i32
  }
  func.func @transform_7(%arg0: i32) -> (i32, i32) {
    %c0_i32 = arith.constant 0 : i32
    %c0_i32_0 = arith.constant 0 : i32
    %c0_i32_1 = arith.constant 0 : i32
    return %c0_i32, %c0_i32_0 : i32, i32
  }
  func.func @transform_8(%arg0: i32) -> (i32, i32, i32) {
    %c0_i32 = arith.constant 0 : i32
    %c0_i32_0 = arith.constant 0 : i32
    %c0_i32_1 = arith.constant 0 : i32
    return %arg0, %c0_i32, %c0_i32_0 : i32, i32, i32
  }
}

</mosaic_0001>

<llo_original>
// kernel: tpu_custom_call.1
$region0: #{tpu_custom_call.1}
  #allocation0 [shape = 'u32[]', space=smem, size = 0x4, offset = 0x4, fixed_abs, tag = 'smem constant byte address 0x4 - core index']
  #allocation1 [shape = 'u32[144,128]{1,0:T(1,128)}', space=vmem, size = 0x12000, scoped, tag = 'internal scratch']
  %s0 = inlined_call_operand.hbm [shape: f32[32,48], index: 0, kind: input, shape index: {}]
  %s1 = inlined_call_operand.hbm [shape: f32[32,64], index: 1, kind: input, shape index: {}]
  %s2 = inlined_call_operand.hbm [shape: f32[48,128], index: 2, kind: input, shape index: {}]
  %s3 = inlined_call_operand.vmem [shape: f32[1,128], index: 3, kind: input, shape index: {}]
  %s4 = inlined_call_operand.hbm [shape: f32[64,128], index: 4, kind: input, shape index: {}]
  %s5 = inlined_call_operand.vmem [shape: f32[1,128], index: 5, kind: input, shape index: {}]
  %s6 = inlined_call_operand.vmem [shape: f32[1,128], index: 6, kind: input, shape index: {}]
  %s7 = inlined_call_operand.vmem [shape: f32[1,128], index: 7, kind: input, shape index: {}]
  %s8 = inlined_call_operand.hbm [shape: f32[4,16,128], index: 8, kind: output, shape index: {}]
  %s9 = sld [smem:[#allocation0]]
  $region58: #{tpu_custom_call.1} parent=0
    _
  %s11 = ssub.s32 1, %s9
  %s12 = scalar_select 0, %s11, %s9
  $region1: #{tpu_custom_call.1} parent=0
    #allocation2 [shape = 'u8[16384]{0}', space=vmem, size = 0x4000, scoped, tag = 'input window, operand 0, single buffered']
    #allocation3 [shape = 's32[1]{0}', space=sflag, size = 0x4, scoped, tag = 'scoped memory for tpu_custom_call.1']
    #allocation4 [shape = 's32[1]{0}', space=sflag, size = 0x4, scoped, tag = 'scoped memory for tpu_custom_call.1']
    #allocation5 [shape = 'u8[16384]{0}', space=vmem, size = 0x4000, scoped, tag = 'input window, operand 1, single buffered']
    #allocation6 [shape = 's32[1]{0}', space=sflag, size = 0x4, scoped, tag = 'scoped memory for tpu_custom_call.1']
    #allocation7 [shape = 'u8[24576]{0}', space=vmem, size = 0x6000, scoped, tag = 'input window, operand 2, single buffered']
    #allocation8 [shape = 'u8[32768]{0}', space=vmem, size = 0x8000, scoped, tag = 'input window, operand 4, single buffered']
    #allocation9 [shape = 's32[1]{0}', space=sflag, size = 0x4, scoped, tag = 'scoped memory for tpu_custom_call.1']
    #allocation10 [shape = 'u8[32768]{0}', space=vmem, size = 0x8000, scoped, tag = 'output window, operand 0, single buffered']
    %13 = vsyncpa [#allocation3], 0
    %14 = vsyncpa [#allocation6], 0
    %15 = vsyncpa [#allocation9], 0
    %16 = vsyncpa [#allocation4], 0
    // Predicated region
    $region2: #{tpu_custom_call.1} parent=1 // pred_check
      _
    $region3: #{tpu_custom_call.1} parent=1 // pred_check_branch
      %18 = sbr.rel (0) target = $region5
    $region4: #{tpu_custom_call.1} parent=1 // pred_region
      %s20 = ssub.s32 512, 512
      %21 = vsyncadd [#allocation3], %s20
      %s22 = sshll.u32 [#allocation2], 4
      %s23 = int_to_ptr.vmem [resolvable:$true] %s22
      %28 = dma.hbm_to_vmem [thread:$0]  %s0, 512, %s23, [#allocation3], 128, 128, 8
    $region5: #{tpu_custom_call.1} parent=1 // pred_fallthru
      _
    // Predicated region
    $region6: #{tpu_custom_call.1} parent=1 // pred_check
      _
    $region7: #{tpu_custom_call.1} parent=1 // pred_check_branch
      %30 = sbr.rel (0) target = $region9
    $region8: #{tpu_custom_call.1} parent=1 // pred_region
      %s32 = ssub.s32 512, 512
      %33 = vsyncadd [#allocation6], %s32
      %s34 = sshll.u32 [#allocation5], 4
      %s35 = int_to_ptr.vmem [resolvable:$true] %s34
      %40 = dma.hbm_to_vmem [thread:$0]  %s1, 512, %s35, [#allocation6], 128, 128, 8
    $region9: #{tpu_custom_call.1} parent=1 // pred_fallthru
      _
    // Predicated region
    $region10: #{tpu_custom_call.1} parent=1 // pred_check
      _
    $region11: #{tpu_custom_call.1} parent=1 // pred_check_branch
      %42 = sbr.rel (0) target = $region13
    $region12: #{tpu_custom_call.1} parent=1 // pred_region
      %s44 = ssub.s32 768, 768
      %45 = vsyncadd [#allocation6], %s44
      %s46 = sshll.u32 [#allocation7], 4
      %s47 = int_to_ptr.vmem [resolvable:$true] %s46
      %52 = dma.hbm_to_vmem [thread:$0]  %s2, 768, %s47, [#allocation6], 128, 128, 8
    $region13: #{tpu_custom_call.1} parent=1 // pred_fallthru
      _
    // Predicated region
    $region14: #{tpu_custom_call.1} parent=1 // pred_check
      _
    $region15: #{tpu_custom_call.1} parent=1 // pred_check_branch
      %54 = sbr.rel (0) target = $region17
    $region16: #{tpu_custom_call.1} parent=1 // pred_region
      _
    $region17: #{tpu_custom_call.1} parent=1 // pred_fallthru
      _
    // Predicated region
    $region18: #{tpu_custom_call.1} parent=1 // pred_check
      _
    $region19: #{tpu_custom_call.1} parent=1 // pred_check_branch
      %56 = sbr.rel (0) target = $region21
    $region20: #{tpu_custom_call.1} parent=1 // pred_region
      %s58 = ssub.s32 1024, 1024
      %59 = vsyncadd [#allocation9], %s58
      %s60 = sshll.u32 [#allocation8], 4
      %s61 = int_to_ptr.vmem [resolvable:$true] %s60
      %66 = dma.hbm_to_vmem [thread:$0]  %s4, 1024, %s61, [#allocation9], 128, 128, 8
    $region21: #{tpu_custom_call.1} parent=1 // pred_fallthru
      _
    // Predicated region
    $region22: #{tpu_custom_call.1} parent=1 // pred_check
      _
    $region23: #{tpu_custom_call.1} parent=1 // pred_check_branch
      %68 = sbr.rel (0) target = $region25
    $region24: #{tpu_custom_call.1} parent=1 // pred_region
      _
    $region25: #{tpu_custom_call.1} parent=1 // pred_fallthru
      _
    // Predicated region
    $region26: #{tpu_custom_call.1} parent=1 // pred_check
      _
    $region27: #{tpu_custom_call.1} parent=1 // pred_check_branch
      %70 = sbr.rel (0) target = $region29
    $region28: #{tpu_custom_call.1} parent=1 // pred_region
      _
    $region29: #{tpu_custom_call.1} parent=1 // pred_fallthru
      _
    // Predicated region
    $region30: #{tpu_custom_call.1} parent=1 // pred_check
      _
    $region31: #{tpu_custom_call.1} parent=1 // pred_check_branch
      %72 = sbr.rel (0) target = $region33
    $region32: #{tpu_custom_call.1} parent=1 // pred_region
      _
    $region33: #{tpu_custom_call.1} parent=1 // pred_fallthru
      _
    // Predicated region
    $region34: #{tpu_custom_call.1} parent=1 // pred_check
      _
    $region35: #{tpu_custom_call.1} parent=1 // pred_check_branch
      %74 = sbr.rel (0) target = $region37
    $region36: #{tpu_custom_call.1} parent=1 // pred_region
      %75 = dma.done [#allocation3], 512
    $region37: #{tpu_custom_call.1} parent=1 // pred_fallthru
      _
    // Predicated region
    $region38: #{tpu_custom_call.1} parent=1 // pred_check
      _
    $region39: #{tpu_custom_call.1} parent=1 // pred_check_branch
      %77 = sbr.rel (0) target = $region41
    $region40: #{tpu_custom_call.1} parent=1 // pred_region
      %78 = dma.done [#allocation6], 512
    $region41: #{tpu_custom_call.1} parent=1 // pred_fallthru
      _
    // Predicated region
    $region42: #{tpu_custom_call.1} parent=1 // pred_check
      _
    $region43: #{tpu_custom_call.1} parent=1 // pred_check_branch
      %80 = sbr.rel (0) target = $region45
    $region44: #{tpu_custom_call.1} parent=1 // pred_region
      %81 = dma.done [#allocation6], 768
    $region45: #{tpu_custom_call.1} parent=1 // pred_fallthru
      _
    // Predicated region
    $region46: #{tpu_custom_call.1} parent=1 // pred_check
      _
    $region47: #{tpu_custom_call.1} parent=1 // pred_check_branch
      %83 = sbr.rel (0) target = $region49
    $region48: #{tpu_custom_call.1} parent=1 // pred_region
      %84 = dma.done [#allocation9], 1024
    $region49: #{tpu_custom_call.1} parent=1 // pred_fallthru
      _
    %v85 = vld [vmem:[%s6] sm:$0x1]
    %v86 = vld [vmem:[%s7] sm:$0x1]
    %v87 = vld [vmem:[#allocation2] sm:$0xff]
    %v88 = vld [vmem:[#allocation2 + $0x8] sm:$0xff]
    %v89 = vld [vmem:[#allocation2 + $0x10] sm:$0xff]
    %v90 = vld [vmem:[#allocation2 + $0x18] sm:$0xff]
    %v91 = vld [vmem:[#allocation7] sm:$0xff]
    %v92 = vld [vmem:[#allocation7 + $0x8] sm:$0xff]
    %v93 = vld [vmem:[#allocation7 + $0x10] sm:$0xff]
    %v94 = vld [vmem:[#allocation7 + $0x18] sm:$0xff]
    %v95 = vld [vmem:[#allocation7 + $0x20] sm:$0xff]
    %v96 = vld [vmem:[#allocation7 + $0x28] sm:$0xff]
    %v97 = vld [vmem:[%s3] sm:$0x1]
    %v99 = vlaneseq
    %v100 = vshrl.u32 %v99, 7
    %v101 = vsub.s32 0, %v100
    %v102 = vrot.slane %v97, %v101
    %vm104 = vcmask 392192
    %v106 = vsel %vm104, %v87, 0
    %v109 = vsel %vm104, %v88, 0
    %v112 = vsel %vm104, %v89, 0
    %v115 = vsel %vm104, %v90, 0
    %117 = vmatprep.subr.mxu0 0.0
    %118 = vmatpush1.msra.mxu0 %v91
    %119 = vmatprep.subr.mxu0 0.0
    %120 = vmatpush1.msra.mxu0 %v92
    %121 = vmatprep.subr.mxu0 0.0
    %122 = vmatpush1.msra.mxu0 %v93
    %123 = vmatprep.subr.mxu0 0.0
    %124 = vmatpush1.msra.mxu0 %v94
    %125 = vmatprep.subr.mxu0 0.0
    %126 = vmatpush1.msra.mxu0 %v95
    %127 = vmatprep.subr.mxu0 0.0
    %128 = vmatpush1.msra.mxu0 %v96
    %129 = vmatprep.subr.mxu0 0.0
    %130 = vmatpush1.msra.mxu0 0.0
    %131 = vmatprep.subr.mxu0 0.0
    %132 = vmatpush1.msra.mxu0 0.0
    %133 = vmatprep.subr.mxu0 0.0
    %134 = vmatpush1.msra.mxu0 0.0
    %135 = vmatprep.subr.mxu0 0.0
    %136 = vmatpush1.msra.mxu0 0.0
    %137 = vmatprep.subr.mxu0 0.0
    %138 = vmatpush1.msra.mxu0 0.0
    %139 = vmatprep.subr.mxu0 0.0
    %140 = vmatpush1.msra.mxu0 0.0
    %141 = vmatprep.subr.mxu0 0.0
    %142 = vmatpush1.msra.mxu0 0.0
    %143 = vmatprep.subr.mxu0 0.0
    %144 = vmatpush1.msra.mxu0 0.0
    %145 = vmatprep.subr.mxu0 0.0
    %146 = vmatpush1.msra.mxu0 0.0
    %147 = vmatprep.subr.mxu0 0.0
    %148 = vmatpush1.msra.mxu0 0.0
    %149 = vmatprep.subr.mxu0 0.0
    %150 = vmatpush1.msra.mxu0 0.0
    %151 = vmatprep.subr.mxu0 0.0
    %152 = vmatpush1.msra.mxu0 0.0
    %153 = vmatprep.subr.mxu0 0.0
    %154 = vmatpush1.msra.mxu0 0.0
    %155 = vmatprep.subr.mxu0 0.0
    %156 = vmatpush1.msra.mxu0 0.0
    %157 = vmatprep.subr.mxu0 0.0
    %158 = vmatpush1.msra.mxu0 0.0
    %159 = vmatprep.subr.mxu0 0.0
    %160 = vmatpush1.msra.mxu0 0.0
    %161 = vmatprep.subr.mxu0 0.0
    %162 = vmatpush1.msra.mxu0 0.0
    %163 = vmatprep.subr.mxu0 0.0
    %164 = vmatpush1.msra.mxu0 0.0
    %165 = vmatprep.subr.mxu0 0.0
    %166 = vmatpush1.msra.mxu0 0.0
    %167 = vmatprep.subr.mxu0 0.0
    %168 = vmatpush1.msra.mxu0 0.0
    %169 = vmatprep.subr.mxu0 0.0
    %170 = vmatpush1.msra.mxu0 0.0
    %171 = vmatprep.subr.mxu0 0.0
    %172 = vmatpush1.msra.mxu0 0.0
    %173 = vmatprep.subr.mxu0 0.0
    %174 = vmatpush1.msra.mxu0 0.0
    %175 = vmatprep.subr.mxu0 0.0
    %176 = vmatpush1.msra.mxu0 0.0
    %177 = vmatprep.subr.mxu0 0.0
    %178 = vmatpush1.msra.mxu0 0.0
    %179 = vmatprep.subr.mxu0 0.0
    %180 = vmatpush1.msra.mxu0 0.0
    %181 = vmatprep.mubr.f32.mxu0 0.0
    %182 = vmatmul.mubr.f32.gmra.mrb[0].mxu0 %v106
    %v183 = vpop.f32.mrb[0].mxu0
    %v184 = vadd.f32 %v102, %v183
    %v185 = vpop.f32.mrb[0].mxu0
    %186 = vmatprep.mubr.f32.mxu0 0.0
    %187 = vmatmul.mubr.f32.gmra.mrb[0].mxu0 %v109
    %v188 = vpop.f32.mrb[0].mxu0
    %v189 = vadd.f32 %v102, %v188
    %v190 = vpop.f32.mrb[0].mxu0
    %191 = vmatprep.mubr.f32.mxu0 0.0
    %192 = vmatmul.mubr.f32.gmra.mrb[0].mxu0 %v112
    %v193 = vpop.f32.mrb[0].mxu0
    %v194 = vadd.f32 %v102, %v193
    %v195 = vpop.f32.mrb[0].mxu0
    %196 = vmatprep.mubr.f32.mxu0 0.0
    %197 = vmatmul.mubr.f32.gmra.mrb[0].mxu0 %v115
    %v198 = vpop.f32.mrb[0].mxu0
    %v199 = vadd.f32 %v102, %v198
    %v200 = vpop.f32.mrb[0].mxu0
    %201 = vdwg.mxu0
    %202 = vadd.xlane.f32.xlu0 %v184
    %v203 = vpop.xlane.xlu0 %202
    %204 = vadd.xlane.f32.xlu0 %v189
    %v205 = vpop.xlane.xlu0 %204
    %206 = vadd.xlane.f32.xlu0 %v194
    %v207 = vpop.xlane.xlu0 %206
    %208 = vadd.xlane.f32.xlu0 %v199
    %v209 = vpop.xlane.xlu0 %208
    %v210 = vrcp.pop 128.0
    %v211 = vmul.f32 %v203, %v210
    %v212 = vmul.f32 %v205, %v210
    %v213 = vmul.f32 %v207, %v210
    %v214 = vmul.f32 %v209, %v210
    %v215 = vsub.f32 %v184, %v211
    %v216 = vsub.f32 %v189, %v212
    %v217 = vsub.f32 %v194, %v213
    %v218 = vsub.f32 %v199, %v214
    %v219 = vmul.f32 %v215, %v215
    %v220 = vmul.f32 %v216, %v216
    %v221 = vmul.f32 %v217, %v217
    %v222 = vmul.f32 %v218, %v218
    %223 = vadd.xlane.f32.xlu0 %v219
    %v224 = vpop.xlane.xlu0 %223
    %225 = vadd.xlane.f32.xlu0 %v220
    %v226 = vpop.xlane.xlu0 %225
    %227 = vadd.xlane.f32.xlu0 %v221
    %v228 = vpop.xlane.xlu0 %227
    %229 = vadd.xlane.f32.xlu0 %v222
    %v230 = vpop.xlane.xlu0 %229
    %v231 = vmul.f32 %v224, %v210
    %v232 = vmul.f32 %v226, %v210
    %v233 = vmul.f32 %v228, %v210
    %v234 = vmul.f32 %v230, %v210
    %v235 = vadd.f32 %v231, 1e-12
    %v236 = vadd.f32 %v232, 1e-12
    %v237 = vadd.f32 %v233, 1e-12
    %v238 = vadd.f32 %v234, 1e-12
    %v239 = vrsqrt.pop %v235
    %v240 = vrsqrt.pop %v236
    %v241 = vrsqrt.pop %v237
    %v242 = vrsqrt.pop %v238
    %v243 = vmul.f32 %v215, %v239
    %v244 = vmul.f32 %v216, %v240
    %v245 = vmul.f32 %v217, %v241
    %v246 = vmul.f32 %v218, %v242
    %v248 = vlaneseq
    %v249 = vshrl.u32 %v248, 7
    %v250 = vsub.s32 0, %v249
    %v251 = vrot.slane %v85, %v250
    %v253 = vmul.f32 %v243, %v251
    %v254 = vmul.f32 %v244, %v251
    %v255 = vmul.f32 %v245, %v251
    %v256 = vmul.f32 %v246, %v251
    %v258 = vlaneseq
    %v259 = vshrl.u32 %v258, 7
    %v260 = vsub.s32 0, %v259
    %v261 = vrot.slane %v86, %v260
    %v263 = vadd.f32 %v253, %v261
    %v264 = vadd.f32 %v254, %v261
    %v265 = vadd.f32 %v255, %v261
    %v266 = vadd.f32 %v256, %v261
    %267 = vst [vmem:[#allocation10] sm:$0xff] %v263
    %268 = vst [vmem:[#allocation10 + $0x10] sm:$0xff] %v264
    %269 = vst [vmem:[#allocation10 + $0x20] sm:$0xff] %v265
    %270 = vst [vmem:[#allocation10 + $0x30] sm:$0xff] %v266
    %v271 = vld [vmem:[#allocation5] sm:$0xff]
    %v272 = vld [vmem:[#allocation5 + $0x8] sm:$0xff]
    %v273 = vld [vmem:[#allocation5 + $0x10] sm:$0xff]
    %v274 = vld [vmem:[#allocation5 + $0x18] sm:$0xff]
    %v275 = vld [vmem:[#allocation8] sm:$0xff]
    %v276 = vld [vmem:[#allocation8 + $0x8] sm:$0xff]
    %v277 = vld [vmem:[#allocation8 + $0x10] sm:$0xff]
    %v278 = vld [vmem:[#allocation8 + $0x18] sm:$0xff]
    %v279 = vld [vmem:[#allocation8 + $0x20] sm:$0xff]
    %v280 = vld [vmem:[#allocation8 + $0x28] sm:$0xff]
    %v281 = vld [vmem:[#allocation8 + $0x30] sm:$0xff]
    %v282 = vld [vmem:[#allocation8 + $0x38] sm:$0xff]
    %v283 = vld [vmem:[%s5] sm:$0x1]
    %v285 = vlaneseq
    %v286 = vshrl.u32 %v285, 7
    %v287 = vsub.s32 0, %v286
    %v288 = vrot.slane %v283, %v287
    %vm290 = vcmask 523264
    %v292 = vsel %vm290, %v271, 0
    %v295 = vsel %vm290, %v272, 0
    %v298 = vsel %vm290, %v273, 0
    %v301 = vsel %vm290, %v274, 0
    %303 = vmatprep.subr.mxu0 0.0
    %304 = vmatpush1.msra.mxu0 %v275
    %305 = vmatprep.subr.mxu0 0.0
    %306 = vmatpush1.msra.mxu0 %v276
    %307 = vmatprep.subr.mxu0 0.0
    %308 = vmatpush1.msra.mxu0 %v277
    %309 = vmatprep.subr.mxu0 0.0
    %310 = vmatpush1.msra.mxu0 %v278
    %311 = vmatprep.subr.mxu0 0.0
    %312 = vmatpush1.msra.mxu0 %v279
    %313 = vmatprep.subr.mxu0 0.0
    %314 = vmatpush1.msra.mxu0 %v280
    %315 = vmatprep.subr.mxu0 0.0
    %316 = vmatpush1.msra.mxu0 %v281
    %317 = vmatprep.subr.mxu0 0.0
    %318 = vmatpush1.msra.mxu0 %v282
    %319 = vmatprep.subr.mxu0 0.0
    %320 = vmatpush1.msra.mxu0 0.0
    %321 = vmatprep.subr.mxu0 0.0
    %322 = vmatpush1.msra.mxu0 0.0
    %323 = vmatprep.subr.mxu0 0.0
    %324 = vmatpush1.msra.mxu0 0.0
    %325 = vmatprep.subr.mxu0 0.0
    %326 = vmatpush1.msra.mxu0 0.0
    %327 = vmatprep.subr.mxu0 0.0
    %328 = vmatpush1.msra.mxu0 0.0
    %329 = vmatprep.subr.mxu0 0.0
    %330 = vmatpush1.msra.mxu0 0.0
    %331 = vmatprep.subr.mxu0 0.0
    %332 = vmatpush1.msra.mxu0 0.0
    %333 = vmatprep.subr.mxu0 0.0
    %334 = vmatpush1.msra.mxu0 0.0
    %335 = vmatprep.subr.mxu0 0.0
    %336 = vmatpush1.msra.mxu0 0.0
    %337 = vmatprep.subr.mxu0 0.0
    %338 = vmatpush1.msra.mxu0 0.0
    %339 = vmatprep.subr.mxu0 0.0
    %340 = vmatpush1.msra.mxu0 0.0
    %341 = vmatprep.subr.mxu0 0.0
    %342 = vmatpush1.msra.mxu0 0.0
    %343 = vmatprep.subr.mxu0 0.0
    %344 = vmatpush1.msra.mxu0 0.0
    %345 = vmatprep.subr.mxu0 0.0
    %346 = vmatpush1.msra.mxu0 0.0
    %347 = vmatprep.subr.mxu0 0.0
    %348 = vmatpush1.msra.mxu0 0.0
    %349 = vmatprep.subr.mxu0 0.0
    %350 = vmatpush1.msra.mxu0 0.0
    %351 = vmatprep.subr.mxu0 0.0
    %352 = vmatpush1.msra.mxu0 0.0
    %353 = vmatprep.subr.mxu0 0.0
    %354 = vmatpush1.msra.mxu0 0.0
    %355 = vmatprep.subr.mxu0 0.0
    %356 = vmatpush1.msra.mxu0 0.0
    %357 = vmatprep.subr.mxu0 0.0
    %358 = vmatpush1.msra.mxu0 0.0
    %359 = vmatprep.subr.mxu0 0.0
    %360 = vmatpush1.msra.mxu0 0.0
    %361 = vmatprep.subr.mxu0 0.0
    %362 = vmatpush1.msra.mxu0 0.0
    %363 = vmatprep.subr.mxu0 0.0
    %364 = vmatpush1.msra.mxu0 0.0
    %365 = vmatprep.subr.mxu0 0.0
    %366 = vmatpush1.msra.mxu0 0.0
    %367 = vmatprep.mubr.f32.mxu0 0.0
    %368 = vmatmul.mubr.f32.gmra.mrb[0].mxu0 %v292
    %v369 = vpop.f32.mrb[0].mxu0
    %v370 = vadd.f32 %v288, %v369
    %v371 = vpop.f32.mrb[0].mxu0
    %372 = vmatprep.mubr.f32.mxu0 0.0
    %373 = vmatmul.mubr.f32.gmra.mrb[0].mxu0 %v295
    %v374 = vpop.f32.mrb[0].mxu0
    %v375 = vadd.f32 %v288, %v374
    %v376 = vpop.f32.mrb[0].mxu0
    %377 = vmatprep.mubr.f32.mxu0 0.0
    %378 = vmatmul.mubr.f32.gmra.mrb[0].mxu0 %v298
    %v379 = vpop.f32.mrb[0].mxu0
    %v380 = vadd.f32 %v288, %v379
    %v381 = vpop.f32.mrb[0].mxu0
    %382 = vmatprep.mubr.f32.mxu0 0.0
    %383 = vmatmul.mubr.f32.gmra.mrb[0].mxu0 %v301
    %v384 = vpop.f32.mrb[0].mxu0
    %v385 = vadd.f32 %v288, %v384
    %v386 = vpop.f32.mrb[0].mxu0
    %387 = vdwg.mxu0
    %388 = vadd.xlane.f32.xlu0 %v370
    %v389 = vpop.xlane.xlu0 %388
    %390 = vadd.xlane.f32.xlu0 %v375
    %v391 = vpop.xlane.xlu0 %390
    %392 = vadd.xlane.f32.xlu0 %v380
    %v393 = vpop.xlane.xlu0 %392
    %394 = vadd.xlane.f32.xlu0 %v385
    %v395 = vpop.xlane.xlu0 %394
    %v396 = vmul.f32 %v389, %v210
    %v397 = vmul.f32 %v391, %v210
    %v398 = vmul.f32 %v393, %v210
    %v399 = vmul.f32 %v395, %v210
    %v400 = vsub.f32 %v370, %v396
    %v401 = vsub.f32 %v375, %v397
    %v402 = vsub.f32 %v380, %v398
    %v403 = vsub.f32 %v385, %v399
    %v404 = vmul.f32 %v400, %v400
    %v405 = vmul.f32 %v401, %v401
    %v406 = vmul.f32 %v402, %v402
    %v407 = vmul.f32 %v403, %v403
    %408 = vadd.xlane.f32.xlu0 %v404
    %v409 = vpop.xlane.xlu0 %408
    %410 = vadd.xlane.f32.xlu0 %v405
    %v411 = vpop.xlane.xlu0 %410
    %412 = vadd.xlane.f32.xlu0 %v406
    %v413 = vpop.xlane.xlu0 %412
    %414 = vadd.xlane.f32.xlu0 %v407
    %v415 = vpop.xlane.xlu0 %414
    %v416 = vmul.f32 %v409, %v210
    %v417 = vmul.f32 %v411, %v210
    %v418 = vmul.f32 %v413, %v210
    %v419 = vmul.f32 %v415, %v210
    %v420 = vadd.f32 %v416, 1e-12
    %v421 = vadd.f32 %v417, 1e-12
    %v422 = vadd.f32 %v418, 1e-12
    %v423 = vadd.f32 %v419, 1e-12
    %v424 = vrsqrt.pop %v420
    %v425 = vrsqrt.pop %v421
    %v426 = vrsqrt.pop %v422
    %v427 = vrsqrt.pop %v423
    %v428 = vmul.f32 %v400, %v424
    %v429 = vmul.f32 %v401, %v425
    %v430 = vmul.f32 %v402, %v426
    %v431 = vmul.f32 %v403, %v427
    %v432 = vmul.f32 %v428, %v251
    %v433 = vmul.f32 %v429, %v251
    %v434 = vmul.f32 %v430, %v251
    %v435 = vmul.f32 %v431, %v251
    %v436 = vadd.f32 %v432, %v261
    %v437 = vadd.f32 %v433, %v261
    %v438 = vadd.f32 %v434, %v261
    %v439 = vadd.f32 %v435, %v261
    %440 = vst [vmem:[#allocation10 + $0x8] sm:$0xff] %v436
    %441 = vst [vmem:[#allocation10 + $0x18] sm:$0xff] %v437
    %442 = vst [vmem:[#allocation10 + $0x28] sm:$0xff] %v438
    %443 = vst [vmem:[#allocation10 + $0x38] sm:$0xff] %v439
    // Predicated region
    $region50: #{tpu_custom_call.1} parent=1 // pred_check
      _
    $region51: #{tpu_custom_call.1} parent=1 // pred_check_branch
      %445 = sbr.rel (0) target = $region53
    $region52: #{tpu_custom_call.1} parent=1 // pred_region
      %s447 = ssub.s32 1024, 1024
      %448 = vsyncadd [#allocation4], %s447
      %s449 = sshll.u32 [#allocation10], 4
      %s450 = int_to_ptr.vmem [resolvable:$true] %s449
      %455 = dma.vmem_to_hbm [thread:$0]  %s450, 1024, %s8, [#allocation4], 128, 128, 8
    $region53: #{tpu_custom_call.1} parent=1 // pred_fallthru
      _
    // Predicated region
    $region54: #{tpu_custom_call.1} parent=1 // pred_check
      _
    $region55: #{tpu_custom_call.1} parent=1 // pred_check_branch
      %457 = sbr.rel (0) target = $region57
    $region56: #{tpu_custom_call.1} parent=1 // pred_region
      %458 = dma.done [#allocation4], 1024
    $region57: #{tpu_custom_call.1} parent=1 // pred_fallthru
      _
    %459 = vsyncpa [#allocation3], 1
    %460 = vsyncpa [#allocation6], 1
    %461 = vsyncpa [#allocation9], 1
    %462 = vsyncpa [#allocation4], 1

</llo_original>
